<compile_context>
chip_gen: v7x
topology: tpu7x:2x2x1
jax: 0.10.0
libtpu: 0.0.40
codegen_flags: <defaults>
</compile_context>

<pallas_src>
import jax
import jax.numpy as jnp
from jax.experimental import pallas as pl
from jax.experimental.pallas import tpu as pltpu


_TM_TARGET = 512      # batch tile (sweep 256/512/1024 at scale; mem-bound)
_TK_TARGET = 2048     # contraction tile (bounds VMEM independent of K)
_LANE = 128


def _round_up(a: int, m: int) -> int:
    return ((a + m - 1) // m) * m


def _k_plan(k: int) -> tuple[int, int]:
    """Pick the K tile and the zero-padded K so that k_pad % tk == 0."""
    tk = min(_TK_TARGET, _round_up(k, _LANE))
    k_pad = _round_up(k, tk)
    return tk, k_pad


def prepare_fnn_params(w: jax.Array, b: jax.Array, compute_dtype=None):
    """One-time parameter prep (do NOT call per forward).

    Args:
      w: PyTorch Linear weight, shape (N, K).
      b: PyTorch Linear bias, shape (N,).
      compute_dtype: optional dtype for the matmul operands (e.g. bf16).
    Returns:
      wt_pad: (K_pad, N_pad) weight, transposed once, zero-padded along K
              (to a multiple of tk) and N (to a multiple of 128).
      b_pad:  (1, N_pad) f32 bias (epilogue math stays in f32).
    """
    n_out, k = w.shape
    _, k_pad = _k_plan(k)
    n_pad = _round_up(n_out, _LANE)
    w_dtype = compute_dtype if compute_dtype is not None else w.dtype

    wt_pad = jnp.zeros((k_pad, n_pad), dtype=w_dtype)
    wt_pad = wt_pad.at[:k, :n_out].set(jnp.transpose(w).astype(w_dtype))

    b_pad = jnp.zeros((1, n_pad), dtype=jnp.float32)
    b_pad = b_pad.at[:, :n_out].set(b.astype(jnp.float32))
    return wt_pad, b_pad


def _fnn_kernel(x_ref, w_ref, b_ref, o_ref, acc_ref):
    kk = pl.program_id(1)

    @pl.when(kk == 0)
    def _init():
        acc_ref[...] = jnp.zeros_like(acc_ref)

    # MXU matmul with f32 accumulation into the VMEM scratch accumulator.
    acc_ref[...] += jnp.dot(x_ref[...], w_ref[...],
                            preferred_element_type=jnp.float32)

    @pl.when(kk == pl.num_programs(1) - 1)
    def _finalize():
        # Fused bias epilogue (f32) + cast; lane-dense (tm, N_pad) store.
        o_ref[...] = (acc_ref[...] + b_ref[...]).astype(o_ref.dtype)


def fnn_forward(x: jax.Array, wt_pad: jax.Array, b_pad: jax.Array,
                n_out: int, compute_dtype=None) -> jax.Array:
    """FNN forward: flatten non-batch dims, then Linear(K -> n_out)."""
    batch = x.shape[0]
    x2d = x.reshape(batch, -1)
    k = x2d.shape[1]

    tk, k_pad = _k_plan(k)
    assert wt_pad.shape[0] == k_pad, "weights not prepared for this input size"
    n_pad = wt_pad.shape[1]
    out_dtype = x.dtype

    if compute_dtype is not None and x2d.dtype != compute_dtype:
        x2d = x2d.astype(compute_dtype)
    if k_pad != k:
        # Zero-pad the contraction dim -> padded columns contribute exactly 0.
        x2d = jnp.pad(x2d, ((0, 0), (0, k_pad - k)))

    # Batch tiling: fixed tile + cdiv grid; rows are independent, so the
    # ragged last tile is safe (padded reads, masked writeback).
    tm = min(_TM_TARGET, batch)
    grid_m = pl.cdiv(batch, tm)
    grid_k = k_pad // tk

    # VMEM budget for this tile plan (double-buffered inputs/outputs + acc),
    # with headroom; stays well inside v7x's 64 MiB and v5e's scoped default.
    x_it = jnp.dtype(x2d.dtype).itemsize
    w_it = jnp.dtype(wt_pad.dtype).itemsize
    o_it = jnp.dtype(out_dtype).itemsize
    est = (2 * tm * tk * x_it + 2 * tk * n_pad * w_it + 2 * n_pad * 4
           + 2 * tm * n_pad * o_it + tm * n_pad * 4)
    vmem_limit = int(min(64 * 2**20, max(32 * 2**20, 2 * est)))

    y_pad = pl.pallas_call(
        _fnn_kernel,
        out_shape=jax.ShapeDtypeStruct((batch, n_pad), out_dtype),
        grid_spec=pltpu.PrefetchScalarGridSpec(
            num_scalar_prefetch=0,
            grid=(grid_m, grid_k),
            in_specs=[
                pl.BlockSpec((tm, tk), lambda i, kk: (i, kk)),      # activations
                pl.BlockSpec((tk, n_pad), lambda i, kk: (kk, 0)),   # weights
                pl.BlockSpec((1, n_pad), lambda i, kk: (0, 0)),     # bias (f32)
            ],
            out_specs=pl.BlockSpec((tm, n_pad), lambda i, kk: (i, 0)),
            scratch_shapes=[pltpu.VMEM((tm, n_pad), jnp.float32)],  # accumulator
        ),
        compiler_params=pltpu.CompilerParams(
            # Batch tiles independent -> shard across TensorCores (v7x);
            # K is a reduction carried in the accumulator -> "arbitrary", last.
            dimension_semantics=("parallel", "arbitrary"),
            vmem_limit_bytes=vmem_limit,
        ),
    )(x2d, wt_pad, b_pad)

    # Lane-dense padded output -> slice back to the real class count.
    return y_pad[:, :n_out]


if __name__ == "__main__":
    key = jax.random.PRNGKey(0)
    kx, kw, kb = jax.random.split(key, 3)

    # Shapes implied by the module: batch_x is (B, H, W); Linear(H*W, classes).
    batch, height, width = 2, 16, 16
    classes_num = 10

    x = jax.random.normal(kx, (batch, height, width), dtype=jnp.float32)
    w = jax.random.normal(kw, (classes_num, height * width), dtype=jnp.float32) * 0.05
    b = jax.random.normal(kb, (classes_num,), dtype=jnp.float32) * 0.05

    # One-time parameter prep (transpose + lane-padding done outside hot path).
    # For v6e/v7x throughput at scale, pass compute_dtype=jnp.bfloat16 to both
    # prepare_fnn_params and fnn_forward; kept f32 here for an exact check.
    wt_pad, b_pad = prepare_fnn_params(w, b)

    y = fnn_forward(x, wt_pad, b_pad, classes_num)
    jax.block_until_ready(y)

    # Pure-JAX reference of the PyTorch forward: x.view(B, -1) @ W.T + b
    ref = x.reshape(batch, -1) @ w.T + b
    assert y.shape == (batch, classes_num) and y.dtype == x.dtype
    assert jnp.allclose(y, ref, atol=1e-5, rtol=1e-5), "mismatch with reference Linear"

    print("KERNEL_OK")
</pallas_src>

<mosaic_0001>
module attributes {stable_mosaic.version = 11 : i64} {
  func.func @_fnn_kernel(%arg0: i32, %arg1: i32, %arg2: memref<2x256xf32, #tpu.memory_space<vmem>>, %arg3: memref<256x128xf32, #tpu.memory_space<vmem>>, %arg4: memref<1x128xf32, #tpu.memory_space<vmem>>, %arg5: memref<2x128xf32, #tpu.memory_space<vmem>>, %arg6: memref<2x128xf32, #tpu.memory_space<vmem>>) attributes {dimension_semantics = [#tpu.dimension_semantics<parallel>, #tpu.dimension_semantics<arbitrary>], iteration_bounds = array<i64: 1, 1>, scalar_prefetch = 0 : i64, scratch_operands = 1 : i64, tpu.core_type = #tpu.core_type<tc>, window_params = [{transform_indices = @transform_0, window_bounds = array<i64: 2, 256>}, {transform_indices = @transform_1, window_bounds = array<i64: 256, 128>}, {pipeline_mode = #tpu.pipeline_mode<synchronous>, transform_indices = @transform_2, window_bounds = array<i64: 1, 128>}, {transform_indices = @transform_3, window_bounds = array<i64: 2, 128>}]} {
    %c0_i32 = arith.constant 0 : i32
    %0 = arith.cmpi eq, %arg1, %c0_i32 : i32
    %1 = arith.extui %0 : i1 to i32
    %c0_i32_0 = arith.constant 0 : i32
    %2 = arith.cmpi ne, %1, %c0_i32_0 : i32
    scf.if %2 {
      %cst_10 = arith.constant 0.000000e+00 : f32
      %12 = vector.broadcast %cst_10 : f32 to vector<2x128xf32>
      %c0_11 = arith.constant 0 : index
      %c0_12 = arith.constant 0 : index
      %13 = vector.load %arg6[%c0_11, %c0_12] : memref<2x128xf32, #tpu.memory_space<vmem>>, vector<2x128xf32>
      tpu.vector_store %arg6[%c0_11, %c0_12], %12 {strides = array<i32>} : memref<2x128xf32, #tpu.memory_space<vmem>>, vector<2x128xf32>,
    } else {
    }
    %c0 = arith.constant 0 : index
    %c0_1 = arith.constant 0 : index
    %3 = vector.load %arg6[%c0, %c0_1] : memref<2x128xf32, #tpu.memory_space<vmem>>, vector<2x128xf32>
    %c0_2 = arith.constant 0 : index
    %c0_3 = arith.constant 0 : index
    %4 = vector.load %arg2[%c0_2, %c0_3] : memref<2x256xf32, #tpu.memory_space<vmem>>, vector<2x256xf32>
    %c0_4 = arith.constant 0 : index
    %c0_5 = arith.constant 0 : index
    %5 = vector.load %arg3[%c0_4, %c0_5] : memref<256x128xf32, #tpu.memory_space<vmem>>, vector<256x128xf32>
    %cst = arith.constant dense<0.000000e+00> : vector<2x128xf32>
    %6 = tpu.matmul %4, %5, %cst {dimension_numbers = #tpu.dot_dimension_numbers<[1], [0], [0], [1], [0, 0, 1, 1], [], []>} : vector<2x256xf32>, vector<256x128xf32>, vector<2x128xf32> -> vector<2x128xf32>
    %7 = arith.addf %3, %6 : vector<2x128xf32>
    %c0_6 = arith.constant 0 : index
    %c0_7 = arith.constant 0 : index
    %8 = vector.load %arg6[%c0_6, %c0_7] : memref<2x128xf32, #tpu.memory_space<vmem>>, vector<2x128xf32>
    tpu.vector_store %arg6[%c0_6, %c0_7], %7 {strides = array<i32>} : memref<2x128xf32, #tpu.memory_space<vmem>>, vector<2x128xf32>,
    %c0_i32_8 = arith.constant 0 : i32
    %9 = arith.cmpi eq, %arg1, %c0_i32_8 : i32
    %10 = arith.extui %9 : i1 to i32
    %c0_i32_9 = arith.constant 0 : i32
    %11 = arith.cmpi ne, %10, %c0_i32_9 : i32
    scf.if %11 {
      %c0_10 = arith.constant 0 : index
      %c0_11 = arith.constant 0 : index
      %12 = vector.load %arg6[%c0_10, %c0_11] : memref<2x128xf32, #tpu.memory_space<vmem>>, vector<2x128xf32>
      %c0_12 = arith.constant 0 : index
      %c0_13 = arith.constant 0 : index
      %13 = vector.load %arg4[%c0_12, %c0_13] : memref<1x128xf32, #tpu.memory_space<vmem>>, vector<1x128xf32>
      %14 = vector.broadcast %13 : vector<1x128xf32> to vector<2x128xf32>
      %15 = arith.addf %12, %14 : vector<2x128xf32>
      %c0_14 = arith.constant 0 : index
      %c0_15 = arith.constant 0 : index
      %16 = vector.load %arg5[%c0_14, %c0_15] : memref<2x128xf32, #tpu.memory_space<vmem>>, vector<2x128xf32>
      tpu.vector_store %arg5[%c0_14, %c0_15], %15 {strides = array<i32>} : memref<2x128xf32, #tpu.memory_space<vmem>>, vector<2x128xf32>,
    } else {
    }
    return
  }
  func.func @transform_0(%arg0: i32, %arg1: i32) -> (i32, i32) {
    %c0_i32 = arith.constant 0 : i32
    return %arg0, %arg1 : i32, i32
  }
  func.func @transform_1(%arg0: i32, %arg1: i32) -> (i32, i32) {
    %c0_i32 = arith.constant 0 : i32
    %c0_i32_0 = arith.constant 0 : i32
    return %arg1, %c0_i32 : i32, i32
  }
  func.func @transform_2(%arg0: i32, %arg1: i32) -> (i32, i32) {
    %c0_i32 = arith.constant 0 : i32
    %c0_i32_0 = arith.constant 0 : i32
    %c0_i32_1 = arith.constant 0 : i32
    return %c0_i32, %c0_i32_0 : i32, i32
  }
  func.func @transform_3(%arg0: i32, %arg1: i32) -> (i32, i32) {
    %c0_i32 = arith.constant 0 : i32
    %c0_i32_0 = arith.constant 0 : i32
    return %arg0, %c0_i32 : i32, i32
  }
}

</mosaic_0001>

<llo_original>
// kernel: tpu_custom_call.1
$region0: #{tpu_custom_call.1}
  #allocation0 [shape = 'u32[]', space=smem, size = 0x4, offset = 0x4, fixed_abs, tag = 'smem constant byte address 0x4 - core index']
  #allocation1 [shape = 'u32[144,128]{1,0:T(1,128)}', space=vmem, size = 0x12000, scoped, tag = 'internal scratch']
  #allocation2 [shape = 'f32[2,128]{1,0:T(2,128)}', space=vmem, size = 0x400, scoped, tag = 'scratch operand']
  %s0 = inlined_call_operand.hbm [shape: f32[2,256], index: 0, kind: input, shape index: {}]
  %s1 = inlined_call_operand.hbm [shape: f32[256,128], index: 1, kind: input, shape index: {}]
  %s2 = inlined_call_operand.vmem [shape: f32[1,128], index: 2, kind: input, shape index: {}]
  %s3 = inlined_call_operand.hbm [shape: f32[2,128], index: 3, kind: output, shape index: {}]
  %s4 = sld [smem:[#allocation0]]
  $region38: #{tpu_custom_call.1} parent=0
    _
  %s6 = ssub.s32 1, %s4
  %s7 = scalar_select 0, %s6, %s4
  $region1: #{tpu_custom_call.1} parent=0
    #allocation3 [shape = 'u8[2048]{0}', space=vmem, size = 0x800, scoped, tag = 'input window, operand 0, single buffered']
    #allocation4 [shape = 's32[1]{0}', space=sflag, size = 0x4, scoped, tag = 'scoped memory for tpu_custom_call.1']
    #allocation5 [shape = 's32[1]{0}', space=sflag, size = 0x4, scoped, tag = 'scoped memory for tpu_custom_call.1']
    #allocation6 [shape = 'u8[131072]{0}', space=vmem, size = 0x20000, scoped, tag = 'input window, operand 1, single buffered']
    #allocation7 [shape = 's32[1]{0}', space=sflag, size = 0x4, scoped, tag = 'scoped memory for tpu_custom_call.1']
    #allocation8 [shape = 'u8[1024]{0}', space=vmem, size = 0x400, scoped, tag = 'output window, operand 0, single buffered']
    %8 = vsyncpa [#allocation4], 0
    %9 = vsyncpa [#allocation7], 0
    %10 = vsyncpa [#allocation5], 0
    // Predicated region
    $region2: #{tpu_custom_call.1} parent=1 // pred_check
      _
    $region3: #{tpu_custom_call.1} parent=1 // pred_check_branch
      %12 = sbr.rel (0) target = $region5
    $region4: #{tpu_custom_call.1} parent=1 // pred_region
      %s14 = ssub.s32 64, 64
      %15 = vsyncadd [#allocation4], %s14
      %s17 = sshll.u32 [#allocation3], 4
      %s18 = int_to_ptr.vmem [resolvable:$true] %s17
      %20 = dma.hbm_to_vmem [thread:$0]  %s0, 64, %s18, [#allocation4]
    $region5: #{tpu_custom_call.1} parent=1 // pred_fallthru
      _
    // Predicated region
    $region6: #{tpu_custom_call.1} parent=1 // pred_check
      _
    $region7: #{tpu_custom_call.1} parent=1 // pred_check_branch
      %22 = sbr.rel (0) target = $region9
    $region8: #{tpu_custom_call.1} parent=1 // pred_region
      %s24 = ssub.s32 4096, 4096
      %25 = vsyncadd [#allocation7], %s24
      %s26 = sshll.u32 [#allocation6], 4
      %s27 = int_to_ptr.vmem [resolvable:$true] %s26
      %32 = dma.hbm_to_vmem [thread:$0]  %s1, 4096, %s27, [#allocation7], 128, 128, 8
    $region9: #{tpu_custom_call.1} parent=1 // pred_fallthru
      _
    // Predicated region
    $region10: #{tpu_custom_call.1} parent=1 // pred_check
      _
    $region11: #{tpu_custom_call.1} parent=1 // pred_check_branch
      %34 = sbr.rel (0) target = $region13
    $region12: #{tpu_custom_call.1} parent=1 // pred_region
      _
    $region13: #{tpu_custom_call.1} parent=1 // pred_fallthru
      _
    // Predicated region
    $region14: #{tpu_custom_call.1} parent=1 // pred_check
      _
    $region15: #{tpu_custom_call.1} parent=1 // pred_check_branch
      %36 = sbr.rel (0) target = $region17
    $region16: #{tpu_custom_call.1} parent=1 // pred_region
      %37 = dma.done [#allocation4], 64
    $region17: #{tpu_custom_call.1} parent=1 // pred_fallthru
      _
    // Predicated region
    $region18: #{tpu_custom_call.1} parent=1 // pred_check
      _
    $region19: #{tpu_custom_call.1} parent=1 // pred_check_branch
      %39 = sbr.rel (0) target = $region21
    $region20: #{tpu_custom_call.1} parent=1 // pred_region
      %40 = dma.done [#allocation7], 4096
    $region21: #{tpu_custom_call.1} parent=1 // pred_fallthru
      _
    %p41 = scmp.eq.s32.totalorder 0, 0
    // Predicated region
    $region22: #{tpu_custom_call.1} parent=1 // pred_check
      %p42 = pneg %p41
    $region23: #{tpu_custom_call.1} parent=1 // pred_check_branch
      %44 = sbr.rel (%p42) target = $region25
    $region24: #{tpu_custom_call.1} parent=1 // pred_region
      %45 = vst [vmem:[#allocation2] sm:$0x3] 0.0
    $region25: #{tpu_custom_call.1} parent=1 // pred_fallthru
      _
    %v46 = vld [vmem:[#allocation2] sm:$0x3]
    %v47 = vld [vmem:[#allocation3] sm:$0xf]
    %v48 = vld [vmem:[#allocation6] sm:$0xff]
    %v49 = vld [vmem:[#allocation6 + $0x8] sm:$0xff]
    %v50 = vld [vmem:[#allocation6 + $0x10] sm:$0xff]
    %v51 = vld [vmem:[#allocation6 + $0x18] sm:$0xff]
    %v52 = vld [vmem:[#allocation6 + $0x20] sm:$0xff]
    %v53 = vld [vmem:[#allocation6 + $0x28] sm:$0xff]
    %v54 = vld [vmem:[#allocation6 + $0x30] sm:$0xff]
    %v55 = vld [vmem:[#allocation6 + $0x38] sm:$0xff]
    %v56 = vld [vmem:[#allocation6 + $0x40] sm:$0xff]
    %v57 = vld [vmem:[#allocation6 + $0x48] sm:$0xff]
    %v58 = vld [vmem:[#allocation6 + $0x50] sm:$0xff]
    %v59 = vld [vmem:[#allocation6 + $0x58] sm:$0xff]
    %v60 = vld [vmem:[#allocation6 + $0x60] sm:$0xff]
    %v61 = vld [vmem:[#allocation6 + $0x68] sm:$0xff]
    %v62 = vld [vmem:[#allocation6 + $0x70] sm:$0xff]
    %v63 = vld [vmem:[#allocation6 + $0x78] sm:$0xff]
    %v64 = vld [vmem:[#allocation6 + $0x80] sm:$0xff]
    %v65 = vld [vmem:[#allocation6 + $0x88] sm:$0xff]
    %v66 = vld [vmem:[#allocation6 + $0x90] sm:$0xff]
    %v67 = vld [vmem:[#allocation6 + $0x98] sm:$0xff]
    %v68 = vld [vmem:[#allocation6 + $0xa0] sm:$0xff]
    %v69 = vld [vmem:[#allocation6 + $0xa8] sm:$0xff]
    %v70 = vld [vmem:[#allocation6 + $0xb0] sm:$0xff]
    %v71 = vld [vmem:[#allocation6 + $0xb8] sm:$0xff]
    %v72 = vld [vmem:[#allocation6 + $0xc0] sm:$0xff]
    %v73 = vld [vmem:[#allocation6 + $0xc8] sm:$0xff]
    %v74 = vld [vmem:[#allocation6 + $0xd0] sm:$0xff]
    %v75 = vld [vmem:[#allocation6 + $0xd8] sm:$0xff]
    %v76 = vld [vmem:[#allocation6 + $0xe0] sm:$0xff]
    %v77 = vld [vmem:[#allocation6 + $0xe8] sm:$0xff]
    %v78 = vld [vmem:[#allocation6 + $0xf0] sm:$0xff]
    %v79 = vld [vmem:[#allocation6 + $0xf8] sm:$0xff]
    %v82 = vunpack.c.l.s4 1983009808
    %v83 = vunpack.c.0.s8 %v82
    %v84 = vlaneseq
    %v85 = vshrl.u32 %v84, 7
    %v86 = vsub.s32 %v83, %v85
    %v87 = vrot.slane %v47, %v86
    %v88 = vcombine.high %v87, %v87
    %91 = vmatprep.subr.mxu0 0.0
    %92 = vmatpush1.msra.mxu0 %v48
    %93 = vmatprep.subr.mxu0 0.0
    %94 = vmatpush1.msra.mxu0 %v49
    %95 = vmatprep.subr.mxu0 0.0
    %96 = vmatpush1.msra.mxu0 %v50
    %97 = vmatprep.subr.mxu0 0.0
    %98 = vmatpush1.msra.mxu0 %v51
    %99 = vmatprep.subr.mxu0 0.0
    %100 = vmatpush1.msra.mxu0 %v52
    %101 = vmatprep.subr.mxu0 0.0
    %102 = vmatpush1.msra.mxu0 %v53
    %103 = vmatprep.subr.mxu0 0.0
    %104 = vmatpush1.msra.mxu0 %v54
    %105 = vmatprep.subr.mxu0 0.0
    %106 = vmatpush1.msra.mxu0 %v55
    %107 = vmatprep.subr.mxu0 0.0
    %108 = vmatpush1.msra.mxu0 %v56
    %109 = vmatprep.subr.mxu0 0.0
    %110 = vmatpush1.msra.mxu0 %v57
    %111 = vmatprep.subr.mxu0 0.0
    %112 = vmatpush1.msra.mxu0 %v58
    %113 = vmatprep.subr.mxu0 0.0
    %114 = vmatpush1.msra.mxu0 %v59
    %115 = vmatprep.subr.mxu0 0.0
    %116 = vmatpush1.msra.mxu0 %v60
    %117 = vmatprep.subr.mxu0 0.0
    %118 = vmatpush1.msra.mxu0 %v61
    %119 = vmatprep.subr.mxu0 0.0
    %120 = vmatpush1.msra.mxu0 %v62
    %121 = vmatprep.subr.mxu0 0.0
    %122 = vmatpush1.msra.mxu0 %v63
    %123 = vmatprep.subr.mxu0 0.0
    %124 = vmatpush1.msra.mxu0 %v64
    %125 = vmatprep.subr.mxu0 0.0
    %126 = vmatpush1.msra.mxu0 %v65
    %127 = vmatprep.subr.mxu0 0.0
    %128 = vmatpush1.msra.mxu0 %v66
    %129 = vmatprep.subr.mxu0 0.0
    %130 = vmatpush1.msra.mxu0 %v67
    %131 = vmatprep.subr.mxu0 0.0
    %132 = vmatpush1.msra.mxu0 %v68
    %133 = vmatprep.subr.mxu0 0.0
    %134 = vmatpush1.msra.mxu0 %v69
    %135 = vmatprep.subr.mxu0 0.0
    %136 = vmatpush1.msra.mxu0 %v70
    %137 = vmatprep.subr.mxu0 0.0
    %138 = vmatpush1.msra.mxu0 %v71
    %139 = vmatprep.subr.mxu0 0.0
    %140 = vmatpush1.msra.mxu0 %v72
    %141 = vmatprep.subr.mxu0 0.0
    %142 = vmatpush1.msra.mxu0 %v73
    %143 = vmatprep.subr.mxu0 0.0
    %144 = vmatpush1.msra.mxu0 %v74
    %145 = vmatprep.subr.mxu0 0.0
    %146 = vmatpush1.msra.mxu0 %v75
    %147 = vmatprep.subr.mxu0 0.0
    %148 = vmatpush1.msra.mxu0 %v76
    %149 = vmatprep.subr.mxu0 0.0
    %150 = vmatpush1.msra.mxu0 %v77
    %151 = vmatprep.subr.mxu0 0.0
    %152 = vmatpush1.msra.mxu0 %v78
    %153 = vmatprep.subr.mxu0 0.0
    %154 = vmatpush1.msra.mxu0 %v79
    %155 = vmatprep.mubr.f32.mxu0 %v88
    %156 = vmatmul.mubr.f32.gmra.mrb[0].mxu0 %v87
    %v157 = vpop.f32.mrb[0].mxu0
    %v158 = vadd.f32 0.0, %v157
    %v159 = vpop.f32.mrb[0].mxu0
    %160 = vdwg.mxu0
    %v161 = vadd.f32 %v46, %v158
    %162 = vst [vmem:[#allocation2] sm:$0x3] %v161
    // Predicated region
    $region26: #{tpu_custom_call.1} parent=1 // pred_check
      %p163 = pneg %p41
    $region27: #{tpu_custom_call.1} parent=1 // pred_check_branch
      %165 = sbr.rel (%p163) target = $region29
    $region28: #{tpu_custom_call.1} parent=1 // pred_region
      %v166 = vld [vmem:[#allocation2] sm:$0x3]
      %v167 = vld [vmem:[%s2] sm:$0x1]
      %v169 = vlaneseq
      %v170 = vshrl.u32 %v169, 7
      %v171 = vsub.s32 0, %v170
      %v172 = vrot.slane %v167, %v171
      %v174 = vadd.f32 %v166, %v172
      %175 = vst [vmem:[#allocation8] sm:$0x3] %v174
    $region29: #{tpu_custom_call.1} parent=1 // pred_fallthru
      _
    // Predicated region
    $region30: #{tpu_custom_call.1} parent=1 // pred_check
      _
    $region31: #{tpu_custom_call.1} parent=1 // pred_check_branch
      %177 = sbr.rel (0) target = $region33
    $region32: #{tpu_custom_call.1} parent=1 // pred_region
      %s179 = ssub.s32 32, 32
      %180 = vsyncadd [#allocation5], %s179
      %s182 = sshll.u32 [#allocation8], 4
      %s183 = int_to_ptr.vmem [resolvable:$true] %s182
      %185 = dma.vmem_to_hbm [thread:$0]  %s183, 32, %s3, [#allocation5]
    $region33: #{tpu_custom_call.1} parent=1 // pred_fallthru
      _
    // Predicated region
    $region34: #{tpu_custom_call.1} parent=1 // pred_check
      _
    $region35: #{tpu_custom_call.1} parent=1 // pred_check_branch
      %187 = sbr.rel (0) target = $region37
    $region36: #{tpu_custom_call.1} parent=1 // pred_region
      %188 = dma.done [#allocation5], 32
    $region37: #{tpu_custom_call.1} parent=1 // pred_fallthru
      _
    %189 = vsyncpa [#allocation4], 1
    %190 = vsyncpa [#allocation7], 1
    %191 = vsyncpa [#allocation5], 1

</llo_original>
